<compile_context>
chip_gen: v7x
topology: tpu7x:2x2x1
jax: 0.10.0
libtpu: 0.0.40
codegen_flags: <defaults>
</compile_context>

<pallas_src>
import functools

import jax
import jax.numpy as jnp
from jax import lax
from jax.experimental import pallas as pl
from jax.experimental.pallas import tpu as pltpu

_LANE = 128     # lane width / alignment for the length axis
_CHUNK = 512    # inner sub-tile (lanes) bounding vreg pressure


def _round_up(x, m):
    return ((x + m - 1) // m) * m


def _cdiv(a, b):
    return (a + b - 1) // b


def _mlp_kernel(num_layers, chunk, n_chunks, unroll, x_ref, *refs):
    """refs = (wT_0, b_0, wT_1, b_1, ..., wT_{L-1}, b_{L-1}, out_ref).

    x_ref:   (C_in, tile_l)   -- batch dim squeezed by the BlockSpec.
    out_ref: (C_out, tile_l)
    """
    out_ref = refs[-1]
    param_refs = refs[:-1]

    # Hoist weight loads and the (C_out,1)->(C_out,chunk) bias broadcasts out
    # of the inner chunk loop.
    ws, bs = [], []
    for i in range(num_layers):
        w_t = param_refs[2 * i][...]                       # (C_out_i, C_in_i)
        b = param_refs[2 * i + 1][...]                     # (C_out_i, 1), f32
        ws.append(w_t)
        bs.append(jnp.broadcast_to(b, (b.shape[0], chunk)))

    def compute_chunk(start):
        h = x_ref[:, pl.ds(start, chunk)]                  # (C_in, chunk)
        for i in range(num_layers):
            h = jnp.dot(ws[i], h.astype(ws[i].dtype),
                        preferred_element_type=jnp.float32) + bs[i]
            if i < num_layers - 1:
                h = jnp.maximum(h, 0.0)                    # ReLU on all but last
        out_ref[:, pl.ds(start, chunk)] = h.astype(out_ref.dtype)

    if n_chunks == 1:
        compute_chunk(0)
    else:
        def body(j, carry):
            compute_chunk(pl.multiple_of(j * chunk, chunk))
            return carry
        lax.fori_loop(0, n_chunks, body, None, unroll=unroll)


def _choose_tiles(length, n, c_in, c_out, tile_l, itemsize):
    # Lane-axis tile, multiple of 128; never wider than the 128-aligned length.
    tile_l = min(tile_l, _round_up(length, _LANE))
    tile_l = max(_LANE, _round_up(tile_l, _LANE))
    # VMEM budget: keep double-buffered in+out tiles under ~8 MiB (well below
    # the scoped default on v5e/v6e/v7x).
    per_lane = 2 * (c_in + c_out) * itemsize
    tile_budget = max(_LANE, (8 * 1024 * 1024 // per_lane) // _LANE * _LANE)
    tile_l = min(tile_l, tile_budget)
    # Keep at least 2 grid steps when possible so both v7x TensorCores get work.
    if n * _cdiv(length, tile_l) < 2 and length > _LANE:
        tile_l = _round_up(_cdiv(length, 2), _LANE)
    # The DMA tile must be a whole number of inner chunks.
    if tile_l >= _CHUNK:
        tile_l = _round_up(tile_l, _CHUNK)
        chunk = _CHUNK
    else:
        chunk = tile_l
    return tile_l, chunk


def mlp_pallas(x_ncl, weights, biases, *, tile_l=8192, use_bf16=False):
    """x_ncl: (N, C_in, L).  weights[i]: (C_in_i, C_out_i), biases[i]: (C_out_i,)."""
    num_layers = len(weights)
    n, c_in, length = x_ncl.shape
    c_out = weights[-1].shape[1]
    out_dtype = x_ncl.dtype
    itemsize = jnp.dtype(x_ncl.dtype).itemsize

    tile_l, chunk = _choose_tiles(length, n, c_in, c_out, tile_l, itemsize)
    n_chunks = tile_l // chunk
    unroll = True if n_chunks <= 8 else 8

    # Params: weights pre-transposed to (C_out, C_in) so the kernel does
    # W^T @ X; biases as (C_out, 1) f32 columns broadcast along the lane axis.
    param_dtype = jnp.bfloat16 if use_bf16 else x_ncl.dtype
    params = []
    in_specs = [pl.BlockSpec((None, c_in, tile_l), lambda b, l: (b, 0, l))]
    for w, bias in zip(weights, biases):
        w_t = jnp.transpose(w).astype(param_dtype)         # (C_out_i, C_in_i)
        b2 = bias.reshape(-1, 1).astype(jnp.float32)       # (C_out_i, 1)
        params += [w_t, b2]
        # Whole-array blocks + constant index_map -> resident across the grid.
        in_specs += [
            pl.BlockSpec(w_t.shape, lambda b, l: (0, 0)),
            pl.BlockSpec(b2.shape, lambda b, l: (0, 0)),
        ]

    out_specs = pl.BlockSpec((None, c_out, tile_l), lambda b, l: (b, 0, l))
    grid = (n, _cdiv(length, tile_l))   # batch x length-tiles; both parallel

    flops = 2 * n * length * sum(int(w.shape[0]) * int(w.shape[1]) for w in weights)
    bytes_accessed = (
        n * c_in * length * itemsize
        + n * c_out * length * jnp.dtype(out_dtype).itemsize
        + sum(int(w.size) * jnp.dtype(param_dtype).itemsize for w in weights)
        + sum(int(b.size) * 4 for b in biases))

    return pl.pallas_call(
        functools.partial(_mlp_kernel, num_layers, chunk, n_chunks, unroll),
        out_shape=jax.ShapeDtypeStruct((n, c_out, length), out_dtype),
        grid_spec=pl.GridSpec(
            grid=grid,
            in_specs=in_specs,
            out_specs=out_specs,
        ),
        compiler_params=pltpu.CompilerParams(
            dimension_semantics=("parallel", "parallel")),
        cost_estimate=pl.CostEstimate(
            flops=int(flops), transcendentals=0,
            bytes_accessed=int(bytes_accessed)),
    )(x_ncl, *params)


def mlp_reference(x_ncl, weights, biases):
    """Pure-JAX reference matching the PyTorch MLP.forward semantics (NCL layout)."""
    h = x_ncl
    num_layers = len(weights)
    for i, (w, b) in enumerate(zip(weights, biases)):
        h = jnp.einsum("ck,ncl->nkl", w, h) + b.reshape(1, -1, 1)
        if i < num_layers - 1:
            h = jnp.maximum(h, 0.0)
    return h


def _make_params(key, dims):
    weights, biases = [], []
    for i in range(len(dims) - 1):
        kw, kb, key = jax.random.split(key, 3)
        bound = 1.0 / (dims[i] ** 0.5)
        # Conv1d(n, k, 1) weight is (k, n, 1); we store its matmul form (n, k).
        w = jax.random.uniform(kw, (dims[i], dims[i + 1]), jnp.float32, -bound, bound)
        b = jax.random.uniform(kb, (dims[i + 1],), jnp.float32, -bound, bound)
        weights.append(w)
        biases.append(b)
    return weights, biases, key


if __name__ == "__main__":
    # Module config (synthetic, deterministic init).
    input_dim, hidden_dim, output_dim, num_layers = 16, 32, 8, 3
    batch, length = 2, 200   # non-multiple-of-128 length exercises the partial block

    key = jax.random.PRNGKey(0)
    dims = [input_dim] + [hidden_dim] * (num_layers - 1) + [output_dim]
    weights, biases, key = _make_params(key, dims)

    k_x, key = jax.random.split(key)
    x = jax.random.normal(k_x, (batch, input_dim, length), dtype=jnp.float32)
    ref = mlp_reference(x, weights, biases)

    # f32 path (default): matches the reference (same TPU dot truncation).
    out = jax.block_until_ready(mlp_pallas(x, weights, biases))
    assert out.shape == (batch, output_dim, length)
    assert jnp.allclose(out, ref, atol=1e-5, rtol=1e-5)

    # bf16 weight stream with f32 accumulation (perf option; no wrapper casts).
    out_bf16 = jax.block_until_ready(mlp_pallas(x, weights, biases, use_bf16=True))
    assert out_bf16.shape == (batch, output_dim, length)
    assert jnp.allclose(out_bf16, ref, atol=5e-2, rtol=5e-2)

    # Longer, non-aligned length: exercises the inner chunk loop (n_chunks>1)
    # and the masked partial last block without any wrapper pad/slice.
    k_x2, key = jax.random.split(key)
    x2 = jax.random.normal(k_x2, (batch, input_dim, 1300), dtype=jnp.float32)
    ref2 = mlp_reference(x2, weights, biases)
    out2 = jax.block_until_ready(mlp_pallas(x2, weights, biases))
    assert out2.shape == (batch, output_dim, 1300)
    assert jnp.allclose(out2, ref2, atol=1e-5, rtol=1e-5)

    print("KERNEL_OK")
</pallas_src>

<mosaic_0001>
module attributes {stable_mosaic.version = 11 : i64} {
  func.func @_mlp_kernel(%arg0: i32, %arg1: i32, %arg2: memref<1x16x256xf32, #tpu.memory_space<vmem>>, %arg3: memref<32x16xf32, #tpu.memory_space<vmem>>, %arg4: memref<32x1xf32, #tpu.memory_space<vmem>>, %arg5: memref<32x32xf32, #tpu.memory_space<vmem>>, %arg6: memref<32x1xf32, #tpu.memory_space<vmem>>, %arg7: memref<8x32xf32, #tpu.memory_space<vmem>>, %arg8: memref<8x1xf32, #tpu.memory_space<vmem>>, %arg9: memref<1x8x256xf32, #tpu.memory_space<vmem>>) attributes {dimension_semantics = [#tpu.dimension_semantics<parallel>, #tpu.dimension_semantics<parallel>], iteration_bounds = array<i64: 2, 1>, scalar_prefetch = 0 : i64, scratch_operands = 0 : i64, tpu.core_type = #tpu.core_type<tc>, window_params = [{transform_indices = @transform_0, window_bounds = array<i64: 1, 16, 256>}, {pipeline_mode = #tpu.pipeline_mode<synchronous>, transform_indices = @transform_1, window_bounds = array<i64: 32, 16>}, {pipeline_mode = #tpu.pipeline_mode<synchronous>, transform_indices = @transform_2, window_bounds = array<i64: 32, 1>}, {pipeline_mode = #tpu.pipeline_mode<synchronous>, transform_indices = @transform_3, window_bounds = array<i64: 32, 32>}, {pipeline_mode = #tpu.pipeline_mode<synchronous>, transform_indices = @transform_4, window_bounds = array<i64: 32, 1>}, {pipeline_mode = #tpu.pipeline_mode<synchronous>, transform_indices = @transform_5, window_bounds = array<i64: 8, 32>}, {pipeline_mode = #tpu.pipeline_mode<synchronous>, transform_indices = @transform_6, window_bounds = array<i64: 8, 1>}, {transform_indices = @transform_7, window_bounds = array<i64: 1, 8, 256>}]} {
    %c0 = arith.constant 0 : index
    %c0_0 = arith.constant 0 : index
    %0 = vector.load %arg3[%c0, %c0_0] : memref<32x16xf32, #tpu.memory_space<vmem>>, vector<32x16xf32>
    %c0_1 = arith.constant 0 : index
    %c0_2 = arith.constant 0 : index
    %1 = vector.load %arg4[%c0_1, %c0_2] : memref<32x1xf32, #tpu.memory_space<vmem>>, vector<32x1xf32>
    %2 = vector.shape_cast %1 : vector<32x1xf32> to vector<32x1xf32>
    %3 = vector.broadcast %2 : vector<32x1xf32> to vector<32x256xf32>
    %c0_3 = arith.constant 0 : index
    %c0_4 = arith.constant 0 : index
    %4 = vector.load %arg5[%c0_3, %c0_4] : memref<32x32xf32, #tpu.memory_space<vmem>>, vector<32x32xf32>
    %c0_5 = arith.constant 0 : index
    %c0_6 = arith.constant 0 : index
    %5 = vector.load %arg6[%c0_5, %c0_6] : memref<32x1xf32, #tpu.memory_space<vmem>>, vector<32x1xf32>
    %6 = vector.shape_cast %5 : vector<32x1xf32> to vector<32x1xf32>
    %7 = vector.broadcast %6 : vector<32x1xf32> to vector<32x256xf32>
    %c0_7 = arith.constant 0 : index
    %c0_8 = arith.constant 0 : index
    %8 = vector.load %arg7[%c0_7, %c0_8] : memref<8x32xf32, #tpu.memory_space<vmem>>, vector<8x32xf32>
    %c0_9 = arith.constant 0 : index
    %c0_10 = arith.constant 0 : index
    %9 = vector.load %arg8[%c0_9, %c0_10] : memref<8x1xf32, #tpu.memory_space<vmem>>, vector<8x1xf32>
    %10 = vector.shape_cast %9 : vector<8x1xf32> to vector<8x1xf32>
    %11 = vector.broadcast %10 : vector<8x1xf32> to vector<8x256xf32>
    %c0_11 = arith.constant 0 : index
    %c0_12 = arith.constant 0 : index
    %c0_13 = arith.constant 0 : index
    %12 = vector.load %arg2[%c0_11, %c0_12, %c0_13] : memref<1x16x256xf32, #tpu.memory_space<vmem>>, vector<1x16x256xf32>
    %13 = vector.shape_cast %12 : vector<1x16x256xf32> to vector<16x256xf32>
    %cst = arith.constant dense<0.000000e+00> : vector<32x256xf32>
    %14 = tpu.matmul %0, %13, %cst {dimension_numbers = #tpu.dot_dimension_numbers<[1], [0], [0], [1], [0, 0, 1, 1], [], []>} : vector<32x16xf32>, vector<16x256xf32>, vector<32x256xf32> -> vector<32x256xf32>
    %15 = arith.addf %14, %3 : vector<32x256xf32>
    %cst_14 = arith.constant 0.000000e+00 : f32
    %16 = vector.broadcast %cst_14 : f32 to vector<32x256xf32>
    %17 = arith.maximumf %15, %16 : vector<32x256xf32>
    %cst_15 = arith.constant dense<0.000000e+00> : vector<32x256xf32>
    %18 = tpu.matmul %4, %17, %cst_15 {dimension_numbers = #tpu.dot_dimension_numbers<[1], [0], [0], [1], [0, 0, 1, 1], [], []>} : vector<32x32xf32>, vector<32x256xf32>, vector<32x256xf32> -> vector<32x256xf32>
    %19 = arith.addf %18, %7 : vector<32x256xf32>
    %cst_16 = arith.constant 0.000000e+00 : f32
    %20 = vector.broadcast %cst_16 : f32 to vector<32x256xf32>
    %21 = arith.maximumf %19, %20 : vector<32x256xf32>
    %cst_17 = arith.constant dense<0.000000e+00> : vector<8x256xf32>
    %22 = tpu.matmul %8, %21, %cst_17 {dimension_numbers = #tpu.dot_dimension_numbers<[1], [0], [0], [1], [0, 0, 1, 1], [], []>} : vector<8x32xf32>, vector<32x256xf32>, vector<8x256xf32> -> vector<8x256xf32>
    %23 = arith.addf %22, %11 : vector<8x256xf32>
    %c0_18 = arith.constant 0 : index
    %c0_19 = arith.constant 0 : index
    %c0_20 = arith.constant 0 : index
    %24 = vector.load %arg9[%c0_18, %c0_19, %c0_20] : memref<1x8x256xf32, #tpu.memory_space<vmem>>, vector<1x8x256xf32>
    %25 = vector.shape_cast %24 : vector<1x8x256xf32> to vector<8x256xf32>
    %26 = vector.shape_cast %23 : vector<8x256xf32> to vector<1x8x256xf32>
    tpu.vector_store %arg9[%c0_18, %c0_19, %c0_20], %26 {strides = array<i32>} : memref<1x8x256xf32, #tpu.memory_space<vmem>>, vector<1x8x256xf32>,
    return
  }
  func.func @transform_0(%arg0: i32, %arg1: i32) -> (i32, i32, i32) {
    %c0_i32 = arith.constant 0 : i32
    %c0_i32_0 = arith.constant 0 : i32
    return %arg0, %c0_i32, %arg1 : i32, i32, i32
  }
  func.func @transform_1(%arg0: i32, %arg1: i32) -> (i32, i32) {
    %c0_i32 = arith.constant 0 : i32
    %c0_i32_0 = arith.constant 0 : i32
    %c0_i32_1 = arith.constant 0 : i32
    return %c0_i32, %c0_i32_0 : i32, i32
  }
  func.func @transform_2(%arg0: i32, %arg1: i32) -> (i32, i32) {
    %c0_i32 = arith.constant 0 : i32
    %c0_i32_0 = arith.constant 0 : i32
    %c0_i32_1 = arith.constant 0 : i32
    return %c0_i32, %c0_i32_0 : i32, i32
  }
  func.func @transform_3(%arg0: i32, %arg1: i32) -> (i32, i32) {
    %c0_i32 = arith.constant 0 : i32
    %c0_i32_0 = arith.constant 0 : i32
    %c0_i32_1 = arith.constant 0 : i32
    return %c0_i32, %c0_i32_0 : i32, i32
  }
  func.func @transform_4(%arg0: i32, %arg1: i32) -> (i32, i32) {
    %c0_i32 = arith.constant 0 : i32
    %c0_i32_0 = arith.constant 0 : i32
    %c0_i32_1 = arith.constant 0 : i32
    return %c0_i32, %c0_i32_0 : i32, i32
  }
  func.func @transform_5(%arg0: i32, %arg1: i32) -> (i32, i32) {
    %c0_i32 = arith.constant 0 : i32
    %c0_i32_0 = arith.constant 0 : i32
    %c0_i32_1 = arith.constant 0 : i32
    return %c0_i32, %c0_i32_0 : i32, i32
  }
  func.func @transform_6(%arg0: i32, %arg1: i32) -> (i32, i32) {
    %c0_i32 = arith.constant 0 : i32
    %c0_i32_0 = arith.constant 0 : i32
    %c0_i32_1 = arith.constant 0 : i32
    return %c0_i32, %c0_i32_0 : i32, i32
  }
  func.func @transform_7(%arg0: i32, %arg1: i32) -> (i32, i32, i32) {
    %c0_i32 = arith.constant 0 : i32
    %c0_i32_0 = arith.constant 0 : i32
    return %arg0, %c0_i32, %arg1 : i32, i32, i32
  }
}

</mosaic_0001>

<llo_original>
// kernel: tpu_custom_call.1
$region0: #{tpu_custom_call.1}
  #allocation0 [shape = 'u32[]', space=smem, size = 0x4, offset = 0x4, fixed_abs, tag = 'smem constant byte address 0x4 - core index']
  #allocation1 [shape = 'u32[144,128]{1,0:T(1,128)}', space=vmem, size = 0x12000, scoped, tag = 'internal scratch']
  %s0 = inlined_call_operand.vmem [shape: f32[2,16,200], index: 0, kind: input, shape index: {}]
  %s1 = inlined_call_operand.vmem [shape: f32[32,16], index: 1, kind: input, shape index: {}]
  %s2 = inlined_call_operand.vmem [shape: f32[32,1], index: 2, kind: input, shape index: {}]
  %s3 = inlined_call_operand.vmem [shape: f32[32,32], index: 3, kind: input, shape index: {}]
  %s4 = inlined_call_operand.vmem [shape: f32[32,1], index: 4, kind: input, shape index: {}]
  %s5 = inlined_call_operand.vmem [shape: f32[8,32], index: 5, kind: input, shape index: {}]
  %s6 = inlined_call_operand.vmem [shape: f32[8,1], index: 6, kind: input, shape index: {}]
  %s7 = inlined_call_operand.hbm [shape: f32[2,8,200], index: 7, kind: output, shape index: {}]
  %s8 = sld [smem:[#allocation0]]
  $region61: #{tpu_custom_call.1} parent=0
    _
  %s10 = ssub.s32 1, %s8
  %s11 = scalar_select 0, %s10, %s8
  $region1: #{tpu_custom_call.1} parent=0
    #allocation2 [shape = 'u8[16384]{0}', space=vmem, size = 0x4000, scoped, tag = 'output window, operand 0']
    #allocation3 [shape = 's32[2]{0}', space=sflag, size = 0x8, scoped, tag = 'scoped memory for tpu_custom_call.1']
    %12 = vsyncpa [#allocation3], 0
    %s13 = scalar_lea.sflag [#allocation3], 1
    %14 = vsyncpa %s13, 0
    loop: start=0, step=1, limit=4
    $region2: #{tpu_custom_call.1} parent=1 // loop_pre_header
      _
    $region3: #{tpu_custom_call.1} parent=1 // loop_header
      %s16 = sphi 0, %s20
      %p17 = scmp.ge.s32.totalorder %s16, 4
      %s23 = sphi 0, %s35
      %s24 = sphi 0, %s31
      %s25 = sphi 0, %s23
      %s26 = sphi 0, %s24
      %s27 = sphi 0, %s25
      %s28 = sphi 0, %s26
      %s40 = sphi 0, %s42
      %s43 = sphi 0, %s40
      %s44 = sphi 0, %s43
      %s60 = sphi 0, %s44
      %s64 = sphi 0, %s64
      %s66 = sphi 0, %s64
      %s67 = sphi 0, %s66
      %s81 = sphi 0, %s67
      %s85 = sphi 0, %s85
      %s87 = sphi 0, %s85
      %s88 = sphi 0, %s87
      %s102 = sphi 0, %s88
      %s106 = sphi 0, %s106
      %s108 = sphi 0, %s106
      %s109 = sphi 0, %s108
      %s123 = sphi 0, %s109
      %s127 = sphi 0, %s127
      %s129 = sphi 0, %s127
      %s130 = sphi 0, %s129
      %s144 = sphi 0, %s130
      %s148 = sphi 0, %s148
      %s150 = sphi 0, %s148
      %s151 = sphi 0, %s150
      %s165 = sphi 0, %s151
      %s169 = sphi 0, %s169
      %s171 = sphi 0, %s169
      %s172 = sphi 0, %s171
      %s186 = sphi 0, %s172
      %s194 = sphi 0, %s196
      %s197 = sphi 0, %s194
      %s198 = sphi 0, %s197
      %s214 = sphi 0, %s198
    $region4: #{tpu_custom_call.1} parent=1 // loop_header_branch
      %19 = sbr.rel (%p17) target = $region8
    $region5: #{tpu_custom_call.1} parent=1 // loop_body
      %s21 = ssub.s32 %s16, 1
      %s22 = ssub.s32 %s16, 2
      %s29 = sadd.s32 1, %s24
      %p30 = scmp.ge.s32.totalorder %s29, 1
      %s31 = scalar_select %p30, 0, %s29
      %s32 = sadd.s32 1, %s23
      %s33 = scalar_select %p30, %s32, %s23
      %p34 = scmp.ge.s32.totalorder %s33, 2
      %s35 = scalar_select %p34, 0, %s33
      %s36 = ssub.s32 %s23, %s35
      %s37 = ssub.s32 %s24, %s31
      %s38 = sor.u32 %s36, %s37
      %p39 = scmp.eq.s32.totalorder %s38, 0
      %s41 = sadd.s32 %s40, 1
      %s42 = scalar_select %p39, %s40, %s41
      %p45 = pneg %p39
      %p46 = scmp.eq.s32.totalorder %s16, 1
      %p47 = por %p45, %p46
      %p48 = scmp.ne.s32.totalorder %s40, %s43
      %p49 = scmp.eq.s32.totalorder %s16, 0
      %p50 = por %p48, %p49
      %p51 = scmp.ne.s32.totalorder %s40, %s43
      %p52 = scmp.eq.s32.totalorder %s21, 1
      %p53 = por %p51, %p52
      %p54 = scmp.ne.s32.totalorder %s43, %s44
      %p55 = scmp.eq.s32.totalorder %s21, 0
      %p56 = por %p54, %p55
      %p57 = scmp.ne.s32.totalorder %s43, %s44
      %p58 = scmp.eq.s32.totalorder %s22, 1
      %p59 = por %p57, %p58
      %p61 = scmp.ne.s32.totalorder %s44, %s60
      %p62 = scmp.eq.s32.totalorder %s22, 0
      %p63 = por %p61, %p62
      %s65 = sadd.s32 %s64, 1
      %p68 = scmp.eq.s32.totalorder %s16, 1
      %p69 = scmp.ne.s32.totalorder %s64, %s66
      %p70 = scmp.eq.s32.totalorder %s16, 0
      %p71 = por %p69, %p70
      %p72 = scmp.ne.s32.totalorder %s64, %s66
      %p73 = scmp.eq.s32.totalorder %s21, 1
      %p74 = por %p72, %p73
      %p75 = scmp.ne.s32.totalorder %s66, %s67
      %p76 = scmp.eq.s32.totalorder %s21, 0
      %p77 = por %p75, %p76
      %p78 = scmp.ne.s32.totalorder %s66, %s67
      %p79 = scmp.eq.s32.totalorder %s22, 1
      %p80 = por %p78, %p79
      %p82 = scmp.ne.s32.totalorder %s67, %s81
      %p83 = scmp.eq.s32.totalorder %s22, 0
      %p84 = por %p82, %p83
      %s86 = sadd.s32 %s85, 1
      %p89 = scmp.eq.s32.totalorder %s16, 1
      %p90 = scmp.ne.s32.totalorder %s85, %s87
      %p91 = scmp.eq.s32.totalorder %s16, 0
      %p92 = por %p90, %p91
      %p93 = scmp.ne.s32.totalorder %s85, %s87
      %p94 = scmp.eq.s32.totalorder %s21, 1
      %p95 = por %p93, %p94
      %p96 = scmp.ne.s32.totalorder %s87, %s88
      %p97 = scmp.eq.s32.totalorder %s21, 0
      %p98 = por %p96, %p97
      %p99 = scmp.ne.s32.totalorder %s87, %s88
      %p100 = scmp.eq.s32.totalorder %s22, 1
      %p101 = por %p99, %p100
      %p103 = scmp.ne.s32.totalorder %s88, %s102
      %p104 = scmp.eq.s32.totalorder %s22, 0
      %p105 = por %p103, %p104
      %s107 = sadd.s32 %s106, 1
      %p110 = scmp.eq.s32.totalorder %s16, 1
      %p111 = scmp.ne.s32.totalorder %s106, %s108
      %p112 = scmp.eq.s32.totalorder %s16, 0
      %p113 = por %p111, %p112
      %p114 = scmp.ne.s32.totalorder %s106, %s108
      %p115 = scmp.eq.s32.totalorder %s21, 1
      %p116 = por %p114, %p115
      %p117 = scmp.ne.s32.totalorder %s108, %s109
      %p118 = scmp.eq.s32.totalorder %s21, 0
      %p119 = por %p117, %p118
      %p120 = scmp.ne.s32.totalorder %s108, %s109
      %p121 = scmp.eq.s32.totalorder %s22, 1
      %p122 = por %p120, %p121
      %p124 = scmp.ne.s32.totalorder %s109, %s123
      %p125 = scmp.eq.s32.totalorder %s22, 0
      %p126 = por %p124, %p125
      %s128 = sadd.s32 %s127, 1
      %p131 = scmp.eq.s32.totalorder %s16, 1
      %p132 = scmp.ne.s32.totalorder %s127, %s129
      %p133 = scmp.eq.s32.totalorder %s16, 0
      %p134 = por %p132, %p133
      %p135 = scmp.ne.s32.totalorder %s127, %s129
      %p136 = scmp.eq.s32.totalorder %s21, 1
      %p137 = por %p135, %p136
      %p138 = scmp.ne.s32.totalorder %s129, %s130
      %p139 = scmp.eq.s32.totalorder %s21, 0
      %p140 = por %p138, %p139
      %p141 = scmp.ne.s32.totalorder %s129, %s130
      %p142 = scmp.eq.s32.totalorder %s22, 1
      %p143 = por %p141, %p142
      %p145 = scmp.ne.s32.totalorder %s130, %s144
      %p146 = scmp.eq.s32.totalorder %s22, 0
      %p147 = por %p145, %p146
      %s149 = sadd.s32 %s148, 1
      %p152 = scmp.eq.s32.totalorder %s16, 1
      %p153 = scmp.ne.s32.totalorder %s148, %s150
      %p154 = scmp.eq.s32.totalorder %s16, 0
      %p155 = por %p153, %p154
      %p156 = scmp.ne.s32.totalorder %s148, %s150
      %p157 = scmp.eq.s32.totalorder %s21, 1
      %p158 = por %p156, %p157
      %p159 = scmp.ne.s32.totalorder %s150, %s151
      %p160 = scmp.eq.s32.totalorder %s21, 0
      %p161 = por %p159, %p160
      %p162 = scmp.ne.s32.totalorder %s150, %s151
      %p163 = scmp.eq.s32.totalorder %s22, 1
      %p164 = por %p162, %p163
      %p166 = scmp.ne.s32.totalorder %s151, %s165
      %p167 = scmp.eq.s32.totalorder %s22, 0
      %p168 = por %p166, %p167
      %s170 = sadd.s32 %s169, 1
      %p173 = scmp.eq.s32.totalorder %s16, 1
      %p174 = scmp.ne.s32.totalorder %s169, %s171
      %p175 = scmp.eq.s32.totalorder %s16, 0
      %p176 = por %p174, %p175
      %p177 = scmp.ne.s32.totalorder %s169, %s171
      %p178 = scmp.eq.s32.totalorder %s21, 1
      %p179 = por %p177, %p178
      %p180 = scmp.ne.s32.totalorder %s171, %s172
      %p181 = scmp.eq.s32.totalorder %s21, 0
      %p182 = por %p180, %p181
      %p183 = scmp.ne.s32.totalorder %s171, %s172
      %p184 = scmp.eq.s32.totalorder %s22, 1
      %p185 = por %p183, %p184
      %p187 = scmp.ne.s32.totalorder %s172, %s186
      %p188 = scmp.eq.s32.totalorder %s22, 0
      %p189 = por %p187, %p188
      %s190 = ssub.s32 %s23, %s35
      %s191 = ssub.s32 %s24, %s31
      %s192 = sor.u32 %s190, %s191
      %p193 = scmp.eq.s32.totalorder %s192, 0
      %s195 = sadd.s32 %s194, 1
      %s196 = scalar_select %p193, %s194, %s195
      %p199 = pneg %p193
      %p200 = scmp.eq.s32.totalorder %s16, 1
      %p201 = por %p199, %p200
      %p202 = scmp.ne.s32.totalorder %s194, %s197
      %p203 = scmp.eq.s32.totalorder %s16, 0
      %p204 = por %p202, %p203
      %p205 = scmp.ne.s32.totalorder %s194, %s197
      %p206 = scmp.eq.s32.totalorder %s21, 1
      %p207 = por %p205, %p206
      %p208 = scmp.ne.s32.totalorder %s197, %s198
      %p209 = scmp.eq.s32.totalorder %s21, 0
      %p210 = por %p208, %p209
      %p211 = scmp.ne.s32.totalorder %s197, %s198
      %p212 = scmp.eq.s32.totalorder %s22, 1
      %p213 = por %p211, %p212
      %p215 = scmp.ne.s32.totalorder %s198, %s214
      %p216 = scmp.eq.s32.totalorder %s22, 0
      %p217 = por %p215, %p216
      %p218 = scmp.le.s32.totalorder 1, %s16
      %p219 = scmp.lt.s32.totalorder %s16, 3
      %p220 = pnand %p218, %p219
      %p221 = pneg %p220
      // Predicated region
      $region9: #{tpu_custom_call.1} parent=5 // pred_check
        _
      $region10: #{tpu_custom_call.1} parent=5 // pred_check_branch
        %223 = sbr.rel (%p220) target = $region12
      $region11: #{tpu_custom_call.1} parent=5 // pred_region
        %s224 = ssub.s32 %s16, 1
        // Predicated region
        $region13: #{tpu_custom_call.1} parent=11 // pred_check
          %p225 = pneg %p77
        $region14: #{tpu_custom_call.1} parent=11 // pred_check_branch
          %227 = sbr.rel (%p225) target = $region16
        $region15: #{tpu_custom_call.1} parent=11 // pred_region
          _
        $region16: #{tpu_custom_call.1} parent=11 // pred_fallthru
          _
        // Predicated region
        $region17: #{tpu_custom_call.1} parent=11 // pred_check
          %p228 = pneg %p98
        $region18: #{tpu_custom_call.1} parent=11 // pred_check_branch
          %230 = sbr.rel (%p228) target = $region20
        $region19: #{tpu_custom_call.1} parent=11 // pred_region
          _
        $region20: #{tpu_custom_call.1} parent=11 // pred_fallthru
          _
        // Predicated region
        $region21: #{tpu_custom_call.1} parent=11 // pred_check
          %p231 = pneg %p119
        $region22: #{tpu_custom_call.1} parent=11 // pred_check_branch
          %233 = sbr.rel (%p231) target = $region24
        $region23: #{tpu_custom_call.1} parent=11 // pred_region
          _
        $region24: #{tpu_custom_call.1} parent=11 // pred_fallthru
          _
        // Predicated region
        $region25: #{tpu_custom_call.1} parent=11 // pred_check
          %p234 = pneg %p140
        $region26: #{tpu_custom_call.1} parent=11 // pred_check_branch
          %236 = sbr.rel (%p234) target = $region28
        $region27: #{tpu_custom_call.1} parent=11 // pred_region
          _
        $region28: #{tpu_custom_call.1} parent=11 // pred_fallthru
          _
        // Predicated region
        $region29: #{tpu_custom_call.1} parent=11 // pred_check
          %p237 = pneg %p161
        $region30: #{tpu_custom_call.1} parent=11 // pred_check_branch
          %239 = sbr.rel (%p237) target = $region32
        $region31: #{tpu_custom_call.1} parent=11 // pred_region
          _
        $region32: #{tpu_custom_call.1} parent=11 // pred_fallthru
          _
        // Predicated region
        $region33: #{tpu_custom_call.1} parent=11 // pred_check
          %p240 = pneg %p182
        $region34: #{tpu_custom_call.1} parent=11 // pred_check_branch
          %242 = sbr.rel (%p240) target = $region36
        $region35: #{tpu_custom_call.1} parent=11 // pred_region
          _
        $region36: #{tpu_custom_call.1} parent=11 // pred_fallthru
          _
      $region12: #{tpu_custom_call.1} parent=5 // pred_fallthru
        _
      %p243 = scmp.lt.s32.totalorder %s16, 2
      // Predicated region
      $region37: #{tpu_custom_call.1} parent=5 // pred_check
        %p244 = pneg %p243
      $region38: #{tpu_custom_call.1} parent=5 // pred_check_branch
        %246 = sbr.rel (%p244) target = $region40
      $region39: #{tpu_custom_call.1} parent=5 // pred_region
        // Predicated region
        $region41: #{tpu_custom_call.1} parent=39 // pred_check
          %p247 = pneg %p50
        $region42: #{tpu_custom_call.1} parent=39 // pred_check_branch
          %249 = sbr.rel (%p247) target = $region44
        $region43: #{tpu_custom_call.1} parent=39 // pred_region
          %s250 = smul.u32 2, %s24
          %p251 = scmp.lt.s32.totalorder %s23, 1
          %s252 = scalar_select %p251, %s23, 1
          %p253 = scmp.lt.s32.totalorder %s250, 1
          %s254 = scalar_select %p253, %s250, 1
          %s255 = smul.addr %s252, 4
          %s256 = sadd.s32 %s254, %s255
          %s257 = smul.addr %s256, 8
          %s258 = scalar_lea.vmem %s0, %s257
          %s259 = smul.u32 2, %s24
        $region44: #{tpu_custom_call.1} parent=39 // pred_fallthru
          _
      $region40: #{tpu_custom_call.1} parent=5 // pred_fallthru
        _
      %p260 = scmp.le.s32.totalorder 1, %s16
      %p261 = scmp.lt.s32.totalorder %s16, 3
      %p262 = pnand %p260, %p261
      %p263 = pneg %p262
      // Predicated region
      $region45: #{tpu_custom_call.1} parent=5 // pred_check
        _
      $region46: #{tpu_custom_call.1} parent=5 // pred_check_branch
        %265 = sbr.rel (%p262) target = $region48
      $region47: #{tpu_custom_call.1} parent=5 // pred_region
        %s266 = ssub.s32 %s16, 1
        %s267 = smul.u32 2, %s26
        %p268 = scmp.lt.s32.totalorder %s25, 1
        %s269 = scalar_select %p268, %s25, 1
        %p270 = scmp.lt.s32.totalorder %s267, 1
        %s271 = scalar_select %p270, %s267, 1
        %s272 = smul.addr %s269, 4
        %s273 = sadd.s32 %s271, %s272
        %s274 = smul.addr %s273, 8
        %s275 = scalar_lea.vmem %s0, %s274
        %p276 = pneg %p56
        %p277 = pneg %p53
        %p278 = pneg %p77
        %p279 = pneg %p74
        %p280 = pneg %p98
        %p281 = pneg %p95
        %p282 = pneg %p119
        %p283 = pneg %p116
        %p284 = pneg %p140
        %p285 = pneg %p137
        %p286 = pneg %p161
        %p287 = pneg %p158
        %p288 = pneg %p182
        %p289 = pneg %p179
        %p290 = pneg %p210
        %p291 = pneg %p207
        %s292 = sand.u32 %s197, 1
        %s293 = scalar_lea.sflag [#allocation3], %s292
        %s294 = sand.u32 %s197, 1
        %s295 = smul.addr %s294, 16
        %s296 = scalar_lea.vmem [#allocation2], %s295
        %s297 = smul.u32 2, %s26
        %p298 = scmp.lt.s32.totalorder %s25, 1
        %s299 = scalar_select %p298, %s25, 1
        %p300 = scmp.lt.s32.totalorder %s297, 1
        %s301 = scalar_select %p300, %s297, 1
        %s302 = smul.addr %s299, 4
        %s303 = sadd.s32 %s301, %s302
        %s304 = smul.addr %s303, 8
        %s305 = scalar_lea.vmem %s0, %s304
        %s306 = smul.u32 2, %s26
        %s307 = smul.u32 2, %s26
        %v308 = vld [vmem:[%s1] sm:$0xff]
        %v309 = vld [vmem:[%s1 + $0x8] sm:$0xff]
        %v310 = vld [vmem:[%s1 + $0x10] sm:$0xff]
        %v311 = vld [vmem:[%s1 + $0x18] sm:$0xff]
        %v312 = vld [vmem:[%s2] sm:$0xff]
        %v313 = vld [vmem:[%s2 + $0x8] sm:$0xff]
        %v314 = vld [vmem:[%s2 + $0x10] sm:$0xff]
        %v315 = vld [vmem:[%s2 + $0x18] sm:$0xff]
        %317 = vset.pattern.permute.xlu0 0
        %318 = vperm.xlu0 %317, %v312
        %v319 = vpop.permute.xlu0 %318
        %322 = vset.pattern.permute.xlu0 0
        %323 = vperm.xlu0 %322, %v313
        %v324 = vpop.permute.xlu0 %323
        %327 = vset.pattern.permute.xlu0 0
        %328 = vperm.xlu0 %327, %v314
        %v329 = vpop.permute.xlu0 %328
        %332 = vset.pattern.permute.xlu0 0
        %333 = vperm.xlu0 %332, %v315
        %v334 = vpop.permute.xlu0 %333
        %v336 = vld [vmem:[%s3] sm:$0xff]
        %v337 = vld [vmem:[%s3 + $0x8] sm:$0xff]
        %v338 = vld [vmem:[%s3 + $0x10] sm:$0xff]
        %v339 = vld [vmem:[%s3 + $0x18] sm:$0xff]
        %v340 = vld [vmem:[%s4] sm:$0xff]
        %v341 = vld [vmem:[%s4 + $0x8] sm:$0xff]
        %v342 = vld [vmem:[%s4 + $0x10] sm:$0xff]
        %v343 = vld [vmem:[%s4 + $0x18] sm:$0xff]
        %345 = vset.pattern.permute.xlu0 0
        %346 = vperm.xlu0 %345, %v340
        %v347 = vpop.permute.xlu0 %346
        %350 = vset.pattern.permute.xlu0 0
        %351 = vperm.xlu0 %350, %v341
        %v352 = vpop.permute.xlu0 %351
        %355 = vset.pattern.permute.xlu0 0
        %356 = vperm.xlu0 %355, %v342
        %v357 = vpop.permute.xlu0 %356
        %360 = vset.pattern.permute.xlu0 0
        %361 = vperm.xlu0 %360, %v343
        %v362 = vpop.permute.xlu0 %361
        %v364 = vld [vmem:[%s5] sm:$0xff]
        %v365 = vld [vmem:[%s6] sm:$0xff]
        %367 = vset.pattern.permute.xlu0 0
        %368 = vperm.xlu0 %367, %v365
        %v369 = vpop.permute.xlu0 %368
        %v371 = vld [vmem:[%s305] sm:$0xff]
        %v372 = vld [vmem:[%s305 + $0x8] sm:$0xff]
        %v373 = vld [vmem:[%s305 + $0x10] sm:$0xff]
        %v374 = vld [vmem:[%s305 + $0x18] sm:$0xff]
        %vm375 = vcmask 130048
        %v377 = vsel %vm375, %v308, 0
        %v380 = vsel %vm375, %v309, 0
        %v383 = vsel %vm375, %v310, 0
        %v386 = vsel %vm375, %v311, 0
        %388 = vmatprep.subr.mxu0 %v372
        %389 = vmatpush1.msra.mxu0 %v371
        %390 = vmatprep.subr.mxu0 %v374
        %391 = vmatpush1.msra.mxu0 %v373
        %392 = vmatprep.subr.mxu0 0.0
        %393 = vmatpush1.msra.mxu0 0.0
        %394 = vmatprep.subr.mxu0 0.0
        %395 = vmatpush1.msra.mxu0 0.0
        %396 = vmatprep.subr.mxu0 0.0
        %397 = vmatpush1.msra.mxu0 0.0
        %398 = vmatprep.subr.mxu0 0.0
        %399 = vmatpush1.msra.mxu0 0.0
        %400 = vmatprep.subr.mxu0 0.0
        %401 = vmatpush1.msra.mxu0 0.0
        %402 = vmatprep.subr.mxu0 0.0
        %403 = vmatpush1.msra.mxu0 0.0
        %404 = vmatprep.subr.mxu0 0.0
        %405 = vmatpush1.msra.mxu0 0.0
        %406 = vmatprep.subr.mxu0 0.0
        %407 = vmatpush1.msra.mxu0 0.0
        %408 = vmatprep.subr.mxu0 0.0
        %409 = vmatpush1.msra.mxu0 0.0
        %410 = vmatprep.subr.mxu0 0.0
        %411 = vmatpush1.msra.mxu0 0.0
        %412 = vmatprep.subr.mxu0 0.0
        %413 = vmatpush1.msra.mxu0 0.0
        %414 = vmatprep.subr.mxu0 0.0
        %415 = vmatpush1.msra.mxu0 0.0
        %416 = vmatprep.subr.mxu0 0.0
        %417 = vmatpush1.msra.mxu0 0.0
        %418 = vmatprep.subr.mxu0 0.0
        %419 = vmatpush1.msra.mxu0 0.0
        %420 = vmatprep.subr.mxu0 0.0
        %421 = vmatpush1.msra.mxu0 0.0
        %422 = vmatprep.subr.mxu0 0.0
        %423 = vmatpush1.msra.mxu0 0.0
        %424 = vmatprep.subr.mxu0 0.0
        %425 = vmatpush1.msra.mxu0 0.0
        %426 = vmatprep.subr.mxu0 0.0
        %427 = vmatpush1.msra.mxu0 0.0
        %428 = vmatprep.subr.mxu0 0.0
        %429 = vmatpush1.msra.mxu0 0.0
        %430 = vmatprep.subr.mxu0 0.0
        %431 = vmatpush1.msra.mxu0 0.0
        %432 = vmatprep.subr.mxu0 0.0
        %433 = vmatpush1.msra.mxu0 0.0
        %434 = vmatprep.subr.mxu0 0.0
        %435 = vmatpush1.msra.mxu0 0.0
        %436 = vmatprep.subr.mxu0 0.0
        %437 = vmatpush1.msra.mxu0 0.0
        %438 = vmatprep.subr.mxu0 0.0
        %439 = vmatpush1.msra.mxu0 0.0
        %440 = vmatprep.subr.mxu0 0.0
        %441 = vmatpush1.msra.mxu0 0.0
        %442 = vmatprep.subr.mxu0 0.0
        %443 = vmatpush1.msra.mxu0 0.0
        %444 = vmatprep.subr.mxu0 0.0
        %445 = vmatpush1.msra.mxu0 0.0
        %446 = vmatprep.subr.mxu0 0.0
        %447 = vmatpush1.msra.mxu0 0.0
        %448 = vmatprep.subr.mxu0 0.0
        %449 = vmatpush1.msra.mxu0 0.0
        %450 = vmatprep.subr.mxu0 0.0
        %451 = vmatpush1.msra.mxu0 0.0
        %452 = vmatprep.mubr.f32.mxu0 0.0
        %453 = vmatmul.mubr.f32.gmra.mrb[0].mxu0 %v377
        %v454 = vpop.f32.mrb[0].mxu0
        %v455 = vadd.f32 %v319, %v454
        %v456 = vpop.f32.mrb[0].mxu0
        %v457 = vadd.f32 %v319, %v456
        %458 = vmatprep.mubr.f32.mxu0 0.0
        %459 = vmatmul.mubr.f32.gmra.mrb[0].mxu0 %v380
        %v460 = vpop.f32.mrb[0].mxu0
        %v461 = vadd.f32 %v324, %v460
        %v462 = vpop.f32.mrb[0].mxu0
        %v463 = vadd.f32 %v324, %v462
        %464 = vmatprep.mubr.f32.mxu0 0.0
        %465 = vmatmul.mubr.f32.gmra.mrb[0].mxu0 %v383
        %v466 = vpop.f32.mrb[0].mxu0
        %v467 = vadd.f32 %v329, %v466
        %v468 = vpop.f32.mrb[0].mxu0
        %v469 = vadd.f32 %v329, %v468
        %470 = vmatprep.mubr.f32.mxu0 0.0
        %471 = vmatmul.mubr.f32.gmra.mrb[0].mxu0 %v386
        %v472 = vpop.f32.mrb[0].mxu0
        %v473 = vadd.f32 %v334, %v472
        %v474 = vpop.f32.mrb[0].mxu0
        %v475 = vadd.f32 %v334, %v474
        %476 = vdwg.mxu0
        %v477 = vmax.f32 %v455, 0.0
        %v478 = vmax.f32 %v457, 0.0
        %v479 = vmax.f32 %v461, 0.0
        %v480 = vmax.f32 %v463, 0.0
        %v481 = vmax.f32 %v467, 0.0
        %v482 = vmax.f32 %v469, 0.0
        %v483 = vmax.f32 %v473, 0.0
        %v484 = vmax.f32 %v475, 0.0
        %vm485 = vcmask 261120
        %v487 = vsel %vm485, %v336, 0
        %v490 = vsel %vm485, %v337, 0
        %v493 = vsel %vm485, %v338, 0
        %v496 = vsel %vm485, %v339, 0
        %498 = vmatprep.subr.mxu0 %v478
        %499 = vmatpush1.msra.mxu0 %v477
        %500 = vmatprep.subr.mxu0 %v480
        %501 = vmatpush1.msra.mxu0 %v479
        %502 = vmatprep.subr.mxu0 %v482
        %503 = vmatpush1.msra.mxu0 %v481
        %504 = vmatprep.subr.mxu0 %v484
        %505 = vmatpush1.msra.mxu0 %v483
        %506 = vmatprep.subr.mxu0 0.0
        %507 = vmatpush1.msra.mxu0 0.0
        %508 = vmatprep.subr.mxu0 0.0
        %509 = vmatpush1.msra.mxu0 0.0
        %510 = vmatprep.subr.mxu0 0.0
        %511 = vmatpush1.msra.mxu0 0.0
        %512 = vmatprep.subr.mxu0 0.0
        %513 = vmatpush1.msra.mxu0 0.0
        %514 = vmatprep.subr.mxu0 0.0
        %515 = vmatpush1.msra.mxu0 0.0
        %516 = vmatprep.subr.mxu0 0.0
        %517 = vmatpush1.msra.mxu0 0.0
        %518 = vmatprep.subr.mxu0 0.0
        %519 = vmatpush1.msra.mxu0 0.0
        %520 = vmatprep.subr.mxu0 0.0
        %521 = vmatpush1.msra.mxu0 0.0
        %522 = vmatprep.subr.mxu0 0.0
        %523 = vmatpush1.msra.mxu0 0.0
        %524 = vmatprep.subr.mxu0 0.0
        %525 = vmatpush1.msra.mxu0 0.0
        %526 = vmatprep.subr.mxu0 0.0
        %527 = vmatpush1.msra.mxu0 0.0
        %528 = vmatprep.subr.mxu0 0.0
        %529 = vmatpush1.msra.mxu0 0.0
        %530 = vmatprep.subr.mxu0 0.0
        %531 = vmatpush1.msra.mxu0 0.0
        %532 = vmatprep.subr.mxu0 0.0
        %533 = vmatpush1.msra.mxu0 0.0
        %534 = vmatprep.subr.mxu0 0.0
        %535 = vmatpush1.msra.mxu0 0.0
        %536 = vmatprep.subr.mxu0 0.0
        %537 = vmatpush1.msra.mxu0 0.0
        %538 = vmatprep.subr.mxu0 0.0
        %539 = vmatpush1.msra.mxu0 0.0
        %540 = vmatprep.subr.mxu0 0.0
        %541 = vmatpush1.msra.mxu0 0.0
        %542 = vmatprep.subr.mxu0 0.0
        %543 = vmatpush1.msra.mxu0 0.0
        %544 = vmatprep.subr.mxu0 0.0
        %545 = vmatpush1.msra.mxu0 0.0
        %546 = vmatprep.subr.mxu0 0.0
        %547 = vmatpush1.msra.mxu0 0.0
        %548 = vmatprep.subr.mxu0 0.0
        %549 = vmatpush1.msra.mxu0 0.0
        %550 = vmatprep.subr.mxu0 0.0
        %551 = vmatpush1.msra.mxu0 0.0
        %552 = vmatprep.subr.mxu0 0.0
        %553 = vmatpush1.msra.mxu0 0.0
        %554 = vmatprep.subr.mxu0 0.0
        %555 = vmatpush1.msra.mxu0 0.0
        %556 = vmatprep.subr.mxu0 0.0
        %557 = vmatpush1.msra.mxu0 0.0
        %558 = vmatprep.subr.mxu0 0.0
        %559 = vmatpush1.msra.mxu0 0.0
        %560 = vmatprep.subr.mxu0 0.0
        %561 = vmatpush1.msra.mxu0 0.0
        %562 = vmatprep.mubr.f32.mxu0 0.0
        %563 = vmatmul.mubr.f32.gmra.mrb[0].mxu0 %v487
        %v564 = vpop.f32.mrb[0].mxu0
        %v565 = vadd.f32 %v347, %v564
        %v566 = vpop.f32.mrb[0].mxu0
        %v567 = vadd.f32 %v347, %v566
        %568 = vmatprep.mubr.f32.mxu0 0.0
        %569 = vmatmul.mubr.f32.gmra.mrb[0].mxu0 %v490
        %v570 = vpop.f32.mrb[0].mxu0
        %v571 = vadd.f32 %v352, %v570
        %v572 = vpop.f32.mrb[0].mxu0
        %v573 = vadd.f32 %v352, %v572
        %574 = vmatprep.mubr.f32.mxu0 0.0
        %575 = vmatmul.mubr.f32.gmra.mrb[0].mxu0 %v493
        %v576 = vpop.f32.mrb[0].mxu0
        %v577 = vadd.f32 %v357, %v576
        %v578 = vpop.f32.mrb[0].mxu0
        %v579 = vadd.f32 %v357, %v578
        %580 = vmatprep.mubr.f32.mxu0 0.0
        %581 = vmatmul.mubr.f32.gmra.mrb[0].mxu0 %v496
        %v582 = vpop.f32.mrb[0].mxu0
        %v583 = vadd.f32 %v362, %v582
        %v584 = vpop.f32.mrb[0].mxu0
        %v585 = vadd.f32 %v362, %v584
        %586 = vdwg.mxu0
        %v587 = vmax.f32 %v565, 0.0
        %v588 = vmax.f32 %v567, 0.0
        %v589 = vmax.f32 %v571, 0.0
        %v590 = vmax.f32 %v573, 0.0
        %v591 = vmax.f32 %v577, 0.0
        %v592 = vmax.f32 %v579, 0.0
        %v593 = vmax.f32 %v583, 0.0
        %v594 = vmax.f32 %v585, 0.0
        %v596 = vsel %vm485, %v364, 0
        %598 = vmatprep.subr.mxu0 %v588
        %599 = vmatpush1.msra.mxu0 %v587
        %600 = vmatprep.subr.mxu0 %v590
        %601 = vmatpush1.msra.mxu0 %v589
        %602 = vmatprep.subr.mxu0 %v592
        %603 = vmatpush1.msra.mxu0 %v591
        %604 = vmatprep.subr.mxu0 %v594
        %605 = vmatpush1.msra.mxu0 %v593
        %606 = vmatprep.subr.mxu0 0.0
        %607 = vmatpush1.msra.mxu0 0.0
        %608 = vmatprep.subr.mxu0 0.0
        %609 = vmatpush1.msra.mxu0 0.0
        %610 = vmatprep.subr.mxu0 0.0
        %611 = vmatpush1.msra.mxu0 0.0
        %612 = vmatprep.subr.mxu0 0.0
        %613 = vmatpush1.msra.mxu0 0.0
        %614 = vmatprep.subr.mxu0 0.0
        %615 = vmatpush1.msra.mxu0 0.0
        %616 = vmatprep.subr.mxu0 0.0
        %617 = vmatpush1.msra.mxu0 0.0
        %618 = vmatprep.subr.mxu0 0.0
        %619 = vmatpush1.msra.mxu0 0.0
        %620 = vmatprep.subr.mxu0 0.0
        %621 = vmatpush1.msra.mxu0 0.0
        %622 = vmatprep.subr.mxu0 0.0
        %623 = vmatpush1.msra.mxu0 0.0
        %624 = vmatprep.subr.mxu0 0.0
        %625 = vmatpush1.msra.mxu0 0.0
        %626 = vmatprep.subr.mxu0 0.0
        %627 = vmatpush1.msra.mxu0 0.0
        %628 = vmatprep.subr.mxu0 0.0
        %629 = vmatpush1.msra.mxu0 0.0
        %630 = vmatprep.subr.mxu0 0.0
        %631 = vmatpush1.msra.mxu0 0.0
        %632 = vmatprep.subr.mxu0 0.0
        %633 = vmatpush1.msra.mxu0 0.0
        %634 = vmatprep.subr.mxu0 0.0
        %635 = vmatpush1.msra.mxu0 0.0
        %636 = vmatprep.subr.mxu0 0.0
        %637 = vmatpush1.msra.mxu0 0.0
        %638 = vmatprep.subr.mxu0 0.0
        %639 = vmatpush1.msra.mxu0 0.0
        %640 = vmatprep.subr.mxu0 0.0
        %641 = vmatpush1.msra.mxu0 0.0
        %642 = vmatprep.subr.mxu0 0.0
        %643 = vmatpush1.msra.mxu0 0.0
        %644 = vmatprep.subr.mxu0 0.0
        %645 = vmatpush1.msra.mxu0 0.0
        %646 = vmatprep.subr.mxu0 0.0
        %647 = vmatpush1.msra.mxu0 0.0
        %648 = vmatprep.subr.mxu0 0.0
        %649 = vmatpush1.msra.mxu0 0.0
        %650 = vmatprep.subr.mxu0 0.0
        %651 = vmatpush1.msra.mxu0 0.0
        %652 = vmatprep.subr.mxu0 0.0
        %653 = vmatpush1.msra.mxu0 0.0
        %654 = vmatprep.subr.mxu0 0.0
        %655 = vmatpush1.msra.mxu0 0.0
        %656 = vmatprep.subr.mxu0 0.0
        %657 = vmatpush1.msra.mxu0 0.0
        %658 = vmatprep.subr.mxu0 0.0
        %659 = vmatpush1.msra.mxu0 0.0
        %660 = vmatprep.subr.mxu0 0.0
        %661 = vmatpush1.msra.mxu0 0.0
        %662 = vmatprep.mubr.f32.mxu0 0.0
        %663 = vmatmul.mubr.f32.gmra.mrb[0].mxu0 %v596
        %v664 = vpop.f32.mrb[0].mxu0
        %v665 = vadd.f32 %v369, %v664
        %v666 = vpop.f32.mrb[0].mxu0
        %v667 = vadd.f32 %v369, %v666
        %668 = vdwg.mxu0
        %669 = vst [vmem:[%s296] sm:$0xff] %v665
        %670 = vst [vmem:[%s296 + $0x8] sm:$0xff] %v667
        %s671 = sand.u32 %s197, 1
        %s672 = scalar_lea.sflag [#allocation3], %s671
        %s673 = sand.u32 %s197, 1
        %s674 = smul.addr %s673, 16
        %s675 = scalar_lea.vmem [#allocation2], %s674
        // Predicated region
        $region49: #{tpu_custom_call.1} parent=47 // pred_check
          %p676 = pneg %p207
        $region50: #{tpu_custom_call.1} parent=47 // pred_check_branch
          %678 = sbr.rel (%p676) target = $region52
        $region51: #{tpu_custom_call.1} parent=47 // pred_region
          %s679 = smul.u32 2, %s26
          %s681 = ssub.s32 256, 256
          %682 = vsyncadd %s672, %s681
          %s683 = smul.addr %s25, 2
          %s684 = sadd.s32 %s679, %s683
          %s685 = smul.addr %s684, 128
          %s686 = scalar_lea.hbm %s7, %s685
          %s688 = sshll.u32 %s675, 4
          %s689 = int_to_ptr.vmem [resolvable:$true] %s688
          %691 = dma.vmem_to_hbm [thread:$0]  %s689, 256, %s686, %s672
        $region52: #{tpu_custom_call.1} parent=47 // pred_fallthru
          _
      $region48: #{tpu_custom_call.1} parent=5 // pred_fallthru
        _
      %p692 = scmp.le.s32.totalorder 2, %s16
      // Predicated region
      $region53: #{tpu_custom_call.1} parent=5 // pred_check
        %p693 = pneg %p692
      $region54: #{tpu_custom_call.1} parent=5 // pred_check_branch
        %695 = sbr.rel (%p693) target = $region56
      $region55: #{tpu_custom_call.1} parent=5 // pred_region
        %s696 = ssub.s32 %s16, 2
        // Predicated region
        $region57: #{tpu_custom_call.1} parent=55 // pred_check
          %p697 = pneg %p213
        $region58: #{tpu_custom_call.1} parent=55 // pred_check_branch
          %699 = sbr.rel (%p697) target = $region60
        $region59: #{tpu_custom_call.1} parent=55 // pred_region
          %s700 = sand.u32 %s198, 1
          %s701 = scalar_lea.sflag [#allocation3], %s700
          %s702 = sand.u32 %s198, 1
          %s703 = smul.addr %s702, 16
          %s704 = scalar_lea.vmem [#allocation2], %s703
          %705 = dma.done %s701, 256
        $region60: #{tpu_custom_call.1} parent=55 // pred_fallthru
          _
      $region56: #{tpu_custom_call.1} parent=5 // pred_fallthru
        _
    $region6: #{tpu_custom_call.1} parent=1 // loop_footer
      %s20 = sadd.s32 1, %s16
    $region7: #{tpu_custom_call.1} parent=1 // loop_footer_branch
      %15 = sbr.rel target = $region3
    $region8: #{tpu_custom_call.1} parent=1 // loop_exit
      _
    %706 = vsyncpa [#allocation3], 1
    %s707 = scalar_lea.sflag [#allocation3], 1
    %708 = vsyncpa %s707, 1

</llo_original>
